<compile_context>
chip_gen: v5e
topology: v5e:2x2
jax: 0.10.0
libtpu: 0.0.40
codegen_flags: <defaults>
</compile_context>

<pallas_src>
import functools
import math

import jax
import jax.numpy as jnp
from jax import lax
from jax.experimental import pallas as pl
from jax.experimental.pallas import tpu as pltpu

_LANE = 128
_SUBLANE = 8


def _quad_single_block_kernel(w_ref, o_ref):
    # w_ref: (rows, 128) f32, full array in VMEM.  Unscaled sum of squares.
    w = w_ref[...]
    o_ref[...] = jnp.sum(w * w, axis=(0, 1), keepdims=True)


def _quad_tiled_kernel(valid_rows, block_rows, n_inner, n_blocks,
                       w_ref, o_ref, acc_ref):
    # Grid = (n_outer "parallel", n_inner "arbitrary").  Each outer index owns one
    # (8,128) output block of unscaled partial sums; wrapper reduces + scales.
    c = pl.program_id(0)
    j = pl.program_id(1)

    @pl.when(j == 0)
    def _():
        acc_ref[...] = jnp.zeros_like(acc_ref)

    w = w_ref[...]                              # (block_rows, 128) f32
    blk = c * n_inner + j                       # global row-block id (may overshoot)
    last_blk = n_blocks - 1
    tail_rows = valid_rows - last_blk * block_rows   # static, in (0, block_rows]

    def accum(wv):
        wsq = wv * wv
        # Tile-aligned reshape; reduction over the leading axis is pure vreg adds
        # (VALU), keeping the hot loop free of XLU work and output stores.
        acc_ref[...] += jnp.sum(wsq.reshape(-1, _SUBLANE, _LANE), axis=0)

    if tail_rows == block_rows:
        # Data tiles exactly: only clamped duplicate blocks (blk > last_blk) skip.
        @pl.when(blk <= last_blk)
        def _():
            accum(w)
    else:
        @pl.when(blk < last_blk)
        def _():
            accum(w)                            # unmasked fast path

        @pl.when(blk == last_blk)
        def _():
            row = lax.broadcasted_iota(jnp.int32, w.shape, 0)
            accum(jnp.where(row < tail_rows, w, 0.0))
        # blk > last_blk: duplicate of the clamped last block, contributes nothing.

    @pl.when(j == pl.num_programs(1) - 1)
    def _():
        o_ref[...] = acc_ref[...]


def quad_func_forward(weight, k, *,
                      block_rows=4096,                 # 4096x128 f32 = 2 MiB / tile
                      single_block_budget_bytes=4 << 20,
                      min_pallas_elems=4096,
                      n_outer=2):
    """weight: (1, num_dim) float, k: python float. Returns scalar f32."""
    weight = weight.astype(jnp.float32)
    num_elems = int(weight.size)

    # Fold sqrt(k)^2 / num_elems host-side (math.sqrt: no device round-trip;
    # NaN for k < 0 preserved, matching torch.sqrt).
    kf = float(k)
    sqrt_k = math.sqrt(kf) if kf >= 0.0 else float("nan")
    scale = jnp.float32((sqrt_k * sqrt_k) / float(num_elems))

    # Tiny weights: fused XLA reduction beats the pallas_call fixed cost.
    if num_elems < min_pallas_elems:
        return jnp.sum(weight * weight) * scale

    # Sublane/lane-dense slab (rows, 128).  Free reshape when num_elems % 128 == 0;
    # otherwise pad the tail with zeros (zeros add nothing to the sum of squares).
    w_flat = weight.reshape(-1)
    rows = -(-num_elems // _LANE)
    pad = rows * _LANE - num_elems
    if pad:
        w_flat = jnp.pad(w_flat, (0, pad))
    w2d = w_flat.reshape(rows, _LANE)

    padded_rows = -(-rows // _SUBLANE) * _SUBLANE
    padded_bytes = padded_rows * _LANE * 4      # actual VMEM footprint of one block

    if padded_bytes <= single_block_budget_bytes:
        # Small/medium weight: one DMA, one step, no grid, no scratch.
        out = pl.pallas_call(
            _quad_single_block_kernel,
            out_shape=jax.ShapeDtypeStruct((1, 1), jnp.float32),
            in_specs=[pl.BlockSpec((rows, _LANE), lambda: (0, 0))],
            out_specs=pl.BlockSpec((1, 1), lambda: (0, 0)),
        )(w2d)
        return out[0, 0] * scale

    # Large weight: stream ~2 MiB row-tiles; double-buffered this is ~4 MiB of VMEM,
    # safe under every generation's default scoped limit (16 MiB v5e).
    block_rows = max(_SUBLANE, min(block_rows, padded_rows))
    assert block_rows % _SUBLANE == 0
    n_blocks = -(-rows // block_rows)
    n_outer = max(1, min(n_outer, n_blocks))
    n_inner = -(-n_blocks // n_outer)

    kernel = functools.partial(_quad_tiled_kernel, rows, block_rows,
                               n_inner, n_blocks)
    out = pl.pallas_call(
        kernel,
        out_shape=jax.ShapeDtypeStruct((n_outer * _SUBLANE, _LANE), jnp.float32),
        grid=(n_outer, n_inner),
        in_specs=[pl.BlockSpec(
            (block_rows, _LANE),
            # Clamp overshooting block ids (odd n_blocks split over 2 cores) so the
            # DMA stays in bounds; the kernel skips their contribution.
            lambda c, j: (jnp.minimum(c * n_inner + j, n_blocks - 1), 0))],
        out_specs=pl.BlockSpec((_SUBLANE, _LANE), lambda c, j: (c, 0)),
        scratch_shapes=[pltpu.VMEM((_SUBLANE, _LANE), jnp.float32)],
        compiler_params=pltpu.CompilerParams(
            dimension_semantics=("parallel", "arbitrary")),
    )(w2d)
    # Final reduce of the tiny per-core partial slabs + single scale.
    return jnp.sum(out) * scale


if __name__ == "__main__":
    k = 1.0
    key = jax.random.PRNGKey(0)
    kw, kx, kw2, kw3 = jax.random.split(key, 4)

    num_dim = 32
    weight = jax.random.normal(kw, (1, num_dim), dtype=jnp.float32) * 0.1
    # The module's forward ignores x; construct it anyway for fidelity.
    x = jax.random.normal(kx, (2, num_dim), dtype=jnp.float32)  # unused, as in torch

    def ref_fn(w):
        return jnp.mean(jnp.square(w * jnp.sqrt(jnp.float32(k))))

    # (a) tiny weight -> fused-XLA early-out (default thresholds).
    out_a = jax.block_until_ready(quad_func_forward(weight, k))
    assert jnp.allclose(out_a, ref_fn(weight), rtol=1e-5, atol=1e-8), (out_a, ref_fn(weight))

    # (b) same small weight forced through the single-block Pallas kernel.
    out_b = jax.block_until_ready(quad_func_forward(weight, k, min_pallas_elems=0))
    assert jnp.allclose(out_b, ref_fn(weight), rtol=1e-5, atol=1e-8), (out_b, ref_fn(weight))

    # (c) unaligned width forced through the tiled kernel (exercises tail padding,
    #     last-block row mask, and the clamped duplicate block on the 2-way split).
    w2 = jax.random.normal(kw2, (1, 4100), dtype=jnp.float32) * 0.1
    out_c = jax.block_until_ready(
        quad_func_forward(w2, k, min_pallas_elems=0,
                          single_block_budget_bytes=0, block_rows=8))
    assert jnp.allclose(out_c, ref_fn(w2), rtol=1e-5, atol=1e-8), (out_c, ref_fn(w2))

    # (d) large aligned weight through the default tiled path (2 MiB tiles, 2x2 grid).
    w3 = jax.random.normal(kw3, (1, 1 << 21), dtype=jnp.float32) * 0.1
    out_d = jax.block_until_ready(quad_func_forward(w3, k))
    assert jnp.allclose(out_d, ref_fn(w3), rtol=1e-5, atol=1e-8), (out_d, ref_fn(w3))

    print("KERNEL_OK")
</pallas_src>

<mosaic_0001>
module attributes {stable_mosaic.version = 11 : i64} {
  func.func @_quad_single_block_kernel(%arg0: memref<1x128xf32, #tpu.memory_space<vmem>>, %arg1: memref<1x1xf32, #tpu.memory_space<vmem>>) attributes {dimension_semantics = [], scalar_prefetch = 0 : i64, scratch_operands = 0 : i64, tpu.core_type = #tpu.core_type<tc>} {
    %c0 = arith.constant 0 : index
    %c0_0 = arith.constant 0 : index
    %0 = vector.load %arg0[%c0, %c0_0] : memref<1x128xf32, #tpu.memory_space<vmem>>, vector<1x128xf32>
    %1 = arith.mulf %0, %0 : vector<1x128xf32>
    %2 = vector.shape_cast %1 : vector<1x128xf32> to vector<1x1x128xf32>
    %cst = arith.constant dense<0.000000e+00> : vector<1xf32>
    %3 = vector.multi_reduction <add>, %2, %cst [1, 2] : vector<1x1x128xf32> to vector<1xf32>
    %4 = vector.shape_cast %3 : vector<1xf32> to vector<1x1x1xf32>
    %5 = vector.extract %4[0, 0, 0] : f32 from vector<1x1x1xf32>
    %6 = vector.broadcast %5 : f32 to vector<1x1xf32>
    %c0_1 = arith.constant 0 : index
    %c0_2 = arith.constant 0 : index
    %7 = vector.load %arg1[%c0_1, %c0_2] : memref<1x1xf32, #tpu.memory_space<vmem>>, vector<1x1xf32>
    tpu.vector_store %arg1[%c0_1, %c0_2], %6 {strides = array<i32>} : memref<1x1xf32, #tpu.memory_space<vmem>>, vector<1x1xf32>,
    return
  }
}

</mosaic_0001>

<llo_original>
// kernel: tpu_custom_call.1
$region0: #{tpu_custom_call.1}
  #allocation0 [shape = 'u32[]', space=smem, size = 0x4, offset = 0x4, fixed_abs, tag = 'smem constant byte address 0x4 - core index']
  #allocation1 [shape = 'u32[72,128]{1,0:T(1,128)}', space=vmem, size = 0x9000, scoped, tag = 'internal scratch']
  %s0 = inlined_call_operand.hbm [shape: f32[1,128], index: 0, kind: input, shape index: {}]
  %s1 = inlined_call_operand.hbm [shape: f32[1,1], index: 1, kind: output, shape index: {}]
  %s2 = sld [smem:[#allocation0]]
  $region18: #{tpu_custom_call.1} parent=0
    _
  %s4 = ssub.s32 1, %s2
  %s5 = scalar_select 0, %s4, %s2
  $region1: #{tpu_custom_call.1} parent=0
    #allocation2 [shape = 'u8[512]{0}', space=vmem, size = 0x400, scoped, tag = 'input window, operand 0, single buffered']
    #allocation3 [shape = 's32[1]{0}', space=sflag, size = 0x4, scoped, tag = 'scoped memory for tpu_custom_call.1']
    #allocation4 [shape = 's32[1]{0}', space=sflag, size = 0x4, scoped, tag = 'scoped memory for tpu_custom_call.1']
    #allocation5 [shape = 'u8[512]{0}', space=vmem, size = 0x400, scoped, tag = 'output window, operand 0, single buffered']
    %6 = vsyncpa [#allocation3], 0
    %7 = vsyncpa [#allocation4], 0
    // Predicated region
    $region2: #{tpu_custom_call.1} parent=1 // pred_check
      _
    $region3: #{tpu_custom_call.1} parent=1 // pred_check_branch
      %9 = sbr.rel (0) target = $region5
    $region4: #{tpu_custom_call.1} parent=1 // pred_region
      %11 = vsyncadd [#allocation3], 0
      %s13 = sshll.u32 %s0, 4
      %s14 = int_to_ptr.hbm [resolvable:$true] %s13
      %s15 = sshll.u32 [#allocation2], 4
      %s16 = int_to_ptr.vmem [resolvable:$true] %s15
      %18 = dma.hbm_to_vmem [thread:$0]  %s14, 16, %s16, [#allocation3]
    $region5: #{tpu_custom_call.1} parent=1 // pred_fallthru
      _
    // Predicated region
    $region6: #{tpu_custom_call.1} parent=1 // pred_check
      _
    $region7: #{tpu_custom_call.1} parent=1 // pred_check_branch
      %20 = sbr.rel (0) target = $region9
    $region8: #{tpu_custom_call.1} parent=1 // pred_region
      %22 = dma.done [#allocation3], 16
    $region9: #{tpu_custom_call.1} parent=1 // pred_fallthru
      _
    %v23 = vld [vmem:[#allocation2] sm:$0x1]
    %v24 = vmul.f32 %v23, %v23
    %vm25 = vcmask 1040384
    %v26 = vsel %vm25, %v24, 0.0
    %27 = vadd.xlane.f32.xlu0 %v26
    %v28 = vpop.xlane.xlu0 %27
    %v29 = vrot.slane %v28, 4
    %v30 = vadd.f32 %v28, %v29
    %v31 = vrot.slane %v30, 2
    %v32 = vadd.f32 %v30, %v31
    %v33 = vrot.slane %v32, 1
    %v34 = vadd.f32 %v32, %v33
    %s35 = vtos %v34
    %v36 = vstv %s35
    %vm37 = vcmask 0
    %38 = vst.msk [vmem:[#allocation5] sm:$0x1] %vm37, %v36
    // Predicated region
    $region10: #{tpu_custom_call.1} parent=1 // pred_check
      _
    $region11: #{tpu_custom_call.1} parent=1 // pred_check_branch
      %40 = sbr.rel (0) target = $region13
    $region12: #{tpu_custom_call.1} parent=1 // pred_region
      %42 = vsyncadd [#allocation4], 0
      %s44 = sshll.u32 [#allocation5], 4
      %s45 = int_to_ptr.vmem [resolvable:$true] %s44
      %s46 = sshll.u32 %s1, 4
      %s47 = int_to_ptr.hbm [resolvable:$true] %s46
      %49 = dma.vmem_to_hbm [thread:$0]  %s45, 16, %s47, [#allocation4]
    $region13: #{tpu_custom_call.1} parent=1 // pred_fallthru
      _
    // Predicated region
    $region14: #{tpu_custom_call.1} parent=1 // pred_check
      _
    $region15: #{tpu_custom_call.1} parent=1 // pred_check_branch
      %51 = sbr.rel (0) target = $region17
    $region16: #{tpu_custom_call.1} parent=1 // pred_region
      %53 = dma.done [#allocation4], 16
    $region17: #{tpu_custom_call.1} parent=1 // pred_fallthru
      _
    %54 = vsyncpa [#allocation3], 1
    %55 = vsyncpa [#allocation4], 1

</llo_original>
